<compile_context>
chip_gen: v7x
topology: tpu7x:2x2x1
jax: 0.10.0
libtpu: 0.0.40
codegen_flags: <defaults>
</compile_context>

<pallas_src>
import functools
import re

import jax
import jax.numpy as jnp
from jax.experimental import pallas as pl
from jax.experimental.pallas import tpu as pltpu


def _round_up(x, m):
    return ((x + m - 1) // m) * m


def _chip_config():
    """Best-effort per-TPU-generation tuning knobs (safe defaults if detection fails)."""
    gen = None
    try:
        kind = jax.devices()[0].device_kind
        m = re.search(r"(\d+)", kind)
        if m:
            gen = int(m.group(1))
    except Exception:
        gen = None
    if gen is not None and gen >= 7:
        # v7x: ~3.2 TB/s HBM per TC, 64 MiB physical VMEM, 2 TensorCores per chip.
        return dict(block_budget=12 << 20, vmem_cap=48 << 20, scoped_default=32 << 20,
                    two_core=True, native_subword=True)
    if gen == 6:
        # v6e: ~1.4 TB/s HBM, 128 MiB VMEM (32 MiB scoped default), 1 TensorCore.
        return dict(block_budget=10 << 20, vmem_cap=96 << 20, scoped_default=32 << 20,
                    two_core=False, native_subword=True)
    # v5e / older / unknown: ~0.8 TB/s HBM, 16 MiB scoped-VMEM default, 1 TC, no bf16 VALU.
    return dict(block_budget=5 << 20, vmem_cap=64 << 20, scoped_default=16 << 20,
                two_core=False, native_subword=False)


def _lwa_kernel(s_ref, x_ref, o_ref, *, n_inputs, square_in_f32):
    # s_ref: SMEM (1, N) f32 -- ReLU'd + normalized weights (precomputed in wrapper)
    # x_ref: VMEM (N, TR, TD) -- tile of the stacked inputs
    # o_ref: VMEM (TR, TD)
    acc = None
    for i in range(n_inputs):  # static unrolled loop over the (small) number of inputs
        xi = x_ref[i]
        if square_in_f32:
            xi = xi.astype(jnp.float32)
            term = s_ref[0, i] * (xi * xi)
        else:
            # Square in the native dtype (bf16 VALU on v6e/v7x); accumulate in f32.
            term = s_ref[0, i] * (xi * xi).astype(jnp.float32)
        acc = term if acc is None else acc + term
    o_ref[...] = acc.astype(o_ref.dtype)


def linear_weighted_avg(weights, stacked_inputs, *, epsilon=1e-4,
                        block_budget_bytes=None, vmem_limit_bytes=None):
    """weights: (N,) f32; stacked_inputs: (N, B, D); returns (B, D) in the input dtype."""
    n, B, D = stacked_inputs.shape
    if weights.shape != (n,):
        raise ValueError(f"weights shape {weights.shape} != ({n},)")
    dtype = stacked_inputs.dtype
    itemsize = jnp.dtype(dtype).itemsize
    cfg = _chip_config()
    budget = int(block_budget_bytes) if block_budget_bytes is not None else cfg["block_budget"]

    # Sublane packing multiple: 8 for f32, 16 for bf16, 32 for int8/fp8.
    sub = max(8, 32 // itemsize)
    lane = 128

    # --- Layout: present a lane-dense slab whenever possible (free contiguous reshape). ----
    if D > 0 and (B * D) % lane == 0:
        R, LD = (B * D) // lane, lane          # (N, R, 128): unmasked 128-lane stores
        x = stacked_inputs.reshape(n, R, LD)
    else:
        R, LD = B, D                           # fallback: keep (N, B, D); D is the lane dim
        x = stacked_inputs

    # --- Lane-axis (D) tiling fallback: only when a minimal row tile exceeds the budget. ---
    td = LD
    if n * sub * LD * itemsize > budget and LD > lane:
        td_cand = max(lane, ((budget // (n * sub * itemsize)) // lane) * lane)
        if td_cand < LD:
            td = td_cand

    # --- Row-axis tiling by byte budget (mem-bound kernel: bigger contiguous DMAs win). ----
    bytes_per_row = max(1, n * td * itemsize)
    rows_budget = max(sub, budget // bytes_per_row)
    if rows_budget >= R:
        tr = R                                  # single full-extent block (always legal)
    else:
        tr = max(sub, (rows_budget // sub) * sub)

    # v7x only (2 TensorCores): keep an even number of grid steps on the parallel row axis
    # so neither core idles; on v5e/v6e (1 TC) a single big tile is strictly better.
    steps_r = pl.cdiv(R, tr)
    if cfg["two_core"] and R > sub and steps_r % 2 == 1:
        target = max(2, steps_r + 1)
        tr_cand = _round_up(pl.cdiv(R, target), sub)
        if tr_cand < R:
            tr = tr_cand
            steps_r = pl.cdiv(R, tr)

    grid = (steps_r, pl.cdiv(LD, td))

    # Fold ReLU + final normalization into per-input scalars (scalar preprocessing only):
    #   s_i = relu(w_i) / (sum(relu(w)) + eps)
    w = jnp.maximum(weights.astype(jnp.float32), 0.0)
    s = (w / (jnp.sum(w) + jnp.float32(epsilon))).reshape(1, n)

    # Advisory cost hint for XLA's scheduler: N reads + 1 write of B*D elements.
    cost = pl.CostEstimate(
        flops=3 * n * B * D,
        transcendentals=0,
        bytes_accessed=(n + 1) * B * D * itemsize + n * 4,
    )

    # Scoped-VMEM: request (double-buffered working set + small headroom) only when the
    # per-chip default would be exceeded; cap well under the chip's physical VMEM.
    in_block = n * tr * td * itemsize
    out_block = tr * td * itemsize
    working_set = 2 * (in_block + out_block)
    if vmem_limit_bytes is None and working_set + (2 << 20) > cfg["scoped_default"]:
        vmem_limit_bytes = min(working_set + (4 << 20), cfg["vmem_cap"])

    cp_kwargs = dict(dimension_semantics=("parallel", "parallel"))
    if vmem_limit_bytes is not None:
        cp_kwargs["vmem_limit_bytes"] = int(vmem_limit_bytes)

    square_in_f32 = (itemsize >= 4) or (not cfg["native_subword"]) \
        or not jnp.issubdtype(dtype, jnp.floating)
    kernel = functools.partial(_lwa_kernel, n_inputs=n, square_in_f32=square_in_f32)

    out = pl.pallas_call(
        kernel,
        out_shape=jax.ShapeDtypeStruct((R, LD), dtype),
        grid=grid,
        in_specs=[
            # tiny parameter vector -> SMEM, whole array every grid step
            pl.BlockSpec(memory_space=pltpu.MemorySpace.SMEM),
            # tile rows (and lanes if needed); keep all N inputs per tile
            pl.BlockSpec((n, tr, td), lambda r, c: (0, r, c)),
        ],
        out_specs=pl.BlockSpec((tr, td), lambda r, c: (r, c)),
        compiler_params=pltpu.CompilerParams(**cp_kwargs),
        cost_estimate=cost,
    )(s, x)

    return out.reshape(B, D)


def _reference(weights, inputs_list, epsilon=1e-4):
    w = jnp.maximum(weights.astype(jnp.float32), 0.0)
    res = 0.0
    for i, emb in enumerate(inputs_list):
        res = res + emb.astype(jnp.float32) * w[i] * inputs_list[i].astype(jnp.float32)
    return res / (jnp.sum(w) + jnp.float32(epsilon))


if __name__ == "__main__":
    epsilon = 1e-4

    # Case 1: canonical module use (nn.Parameter(ones(n)/n) init), f32, lane-dense path.
    n_inputs, B, D = 3, 16, 128
    weights = jnp.ones((n_inputs,), jnp.float32) / n_inputs
    keys = jax.random.split(jax.random.PRNGKey(0), n_inputs)
    inputs_list = [jax.random.normal(k, (B, D), jnp.float32) for k in keys]
    out = jax.block_until_ready(
        linear_weighted_avg(weights, jnp.stack(inputs_list, 0), epsilon=epsilon))
    ref = _reference(weights, inputs_list, epsilon=epsilon)
    assert out.shape == (B, D)
    assert jnp.allclose(out, ref, atol=1e-5, rtol=1e-5)

    # Case 2: ragged shapes (B*D not a multiple of 128) exercise the cdiv / masked-store path;
    # includes a negative weight (ReLU'd away).
    n2, B2, D2 = 4, 10, 96
    w2 = jnp.array([0.5, -0.25, 0.75, 0.1], jnp.float32)
    k2 = jax.random.split(jax.random.PRNGKey(1), n2)
    inputs2 = [jax.random.normal(k, (B2, D2), jnp.float32) for k in k2]
    out2 = jax.block_until_ready(
        linear_weighted_avg(w2, jnp.stack(inputs2, 0), epsilon=epsilon))
    ref2 = _reference(w2, inputs2, epsilon=epsilon)
    assert out2.shape == (B2, D2)
    assert jnp.allclose(out2, ref2, atol=1e-5, rtol=1e-5)

    # Case 3: bf16 inputs (native-dtype square on v6e/v7x, f32-cast path elsewhere).
    n3, B3, D3 = 2, 24, 128
    w3 = jnp.array([0.7, 0.3], jnp.float32)
    k3 = jax.random.split(jax.random.PRNGKey(2), n3)
    inputs3 = [jax.random.normal(k, (B3, D3), jnp.float32).astype(jnp.bfloat16) for k in k3]
    out3 = jax.block_until_ready(
        linear_weighted_avg(w3, jnp.stack(inputs3, 0), epsilon=epsilon))
    ref3 = _reference(w3, inputs3, epsilon=epsilon)
    assert out3.shape == (B3, D3)
    assert jnp.allclose(out3.astype(jnp.float32), ref3, atol=3e-2, rtol=3e-2)

    print("KERNEL_OK")
</pallas_src>

<mosaic_0001>
module attributes {stable_mosaic.version = 11 : i64} {
  func.func @_lwa_kernel(%arg0: i32, %arg1: i32, %arg2: memref<1x3xf32, #tpu.memory_space<smem>>, %arg3: memref<3x16x128xf32, #tpu.memory_space<vmem>>, %arg4: memref<16x128xf32, #tpu.memory_space<vmem>>) attributes {dimension_semantics = [#tpu.dimension_semantics<parallel>, #tpu.dimension_semantics<parallel>], iteration_bounds = array<i64: 1, 1>, scalar_prefetch = 0 : i64, scratch_operands = 0 : i64, tpu.core_type = #tpu.core_type<tc>, window_params = [{transform_indices = @transform_0, window_bounds = array<i64: 1, 3>}, {transform_indices = @transform_1, window_bounds = array<i64: 3, 16, 128>}, {transform_indices = @transform_2, window_bounds = array<i64: 16, 128>}]} {
    %c0 = arith.constant 0 : index
    %c0_0 = arith.constant 0 : index
    %c0_1 = arith.constant 0 : index
    %0 = vector.load %arg3[%c0, %c0_0, %c0_1] : memref<3x16x128xf32, #tpu.memory_space<vmem>>, vector<1x16x128xf32>
    %1 = vector.shape_cast %0 : vector<1x16x128xf32> to vector<16x128xf32>
    %c0_2 = arith.constant 0 : index
    %c0_3 = arith.constant 0 : index
    %2 = memref.load %arg2[%c0_2, %c0_3] : memref<1x3xf32, #tpu.memory_space<smem>>
    %3 = arith.mulf %1, %1 : vector<16x128xf32>
    %4 = vector.broadcast %2 : f32 to vector<16x128xf32>
    %5 = arith.mulf %4, %3 : vector<16x128xf32>
    %c1 = arith.constant 1 : index
    %c0_4 = arith.constant 0 : index
    %c0_5 = arith.constant 0 : index
    %6 = vector.load %arg3[%c1, %c0_4, %c0_5] : memref<3x16x128xf32, #tpu.memory_space<vmem>>, vector<1x16x128xf32>
    %7 = vector.shape_cast %6 : vector<1x16x128xf32> to vector<16x128xf32>
    %c0_6 = arith.constant 0 : index
    %c1_7 = arith.constant 1 : index
    %8 = memref.load %arg2[%c0_6, %c1_7] : memref<1x3xf32, #tpu.memory_space<smem>>
    %9 = arith.mulf %7, %7 : vector<16x128xf32>
    %10 = vector.broadcast %8 : f32 to vector<16x128xf32>
    %11 = arith.mulf %10, %9 : vector<16x128xf32>
    %12 = arith.addf %5, %11 : vector<16x128xf32>
    %c2 = arith.constant 2 : index
    %c0_8 = arith.constant 0 : index
    %c0_9 = arith.constant 0 : index
    %13 = vector.load %arg3[%c2, %c0_8, %c0_9] : memref<3x16x128xf32, #tpu.memory_space<vmem>>, vector<1x16x128xf32>
    %14 = vector.shape_cast %13 : vector<1x16x128xf32> to vector<16x128xf32>
    %c0_10 = arith.constant 0 : index
    %c2_11 = arith.constant 2 : index
    %15 = memref.load %arg2[%c0_10, %c2_11] : memref<1x3xf32, #tpu.memory_space<smem>>
    %16 = arith.mulf %14, %14 : vector<16x128xf32>
    %17 = vector.broadcast %15 : f32 to vector<16x128xf32>
    %18 = arith.mulf %17, %16 : vector<16x128xf32>
    %19 = arith.addf %12, %18 : vector<16x128xf32>
    %c0_12 = arith.constant 0 : index
    %c0_13 = arith.constant 0 : index
    %20 = vector.load %arg4[%c0_12, %c0_13] : memref<16x128xf32, #tpu.memory_space<vmem>>, vector<16x128xf32>
    tpu.vector_store %arg4[%c0_12, %c0_13], %19 {strides = array<i32>} : memref<16x128xf32, #tpu.memory_space<vmem>>, vector<16x128xf32>,
    return
  }
  func.func @transform_0(%arg0: i32, %arg1: i32) -> (i32, i32) {
    %c0_i32 = arith.constant 0 : i32
    %c0_i32_0 = arith.constant 0 : i32
    %c0_i32_1 = arith.constant 0 : i32
    return %c0_i32, %c0_i32_0 : i32, i32
  }
  func.func @transform_1(%arg0: i32, %arg1: i32) -> (i32, i32, i32) {
    %c0_i32 = arith.constant 0 : i32
    %c0_i32_0 = arith.constant 0 : i32
    return %c0_i32, %arg0, %arg1 : i32, i32, i32
  }
  func.func @transform_2(%arg0: i32, %arg1: i32) -> (i32, i32) {
    %c0_i32 = arith.constant 0 : i32
    return %arg0, %arg1 : i32, i32
  }
}

</mosaic_0001>

<llo_original>
// kernel: tpu_custom_call.1
$region0: #{tpu_custom_call.1}
  #allocation0 [shape = 'u32[]', space=smem, size = 0x4, offset = 0x4, fixed_abs, tag = 'smem constant byte address 0x4 - core index']
  #allocation1 [shape = 'u32[144,128]{1,0:T(1,128)}', space=vmem, size = 0x12000, scoped, tag = 'internal scratch']
  %s0 = inlined_call_operand.hbm [shape: f32[1,3], index: 0, kind: input, shape index: {}]
  %s1 = inlined_call_operand.hbm [shape: f32[3,16,128], index: 1, kind: input, shape index: {}]
  %s2 = inlined_call_operand.hbm [shape: f32[16,128], index: 2, kind: output, shape index: {}]
  %s3 = sld [smem:[#allocation0]]
  $region26: #{tpu_custom_call.1} parent=0
    _
  %s5 = ssub.s32 1, %s3
  %s6 = scalar_select 0, %s5, %s3
  $region1: #{tpu_custom_call.1} parent=0
    #allocation2 [shape = 'u8[512]{0}', space=smem, size = 0x200, scoped, tag = 'input window, operand 0, single buffered']
    #allocation3 [shape = 's32[1]{0}', space=sflag, size = 0x4, scoped, tag = 'scoped memory for tpu_custom_call.1']
    #allocation4 [shape = 's32[1]{0}', space=sflag, size = 0x4, scoped, tag = 'scoped memory for tpu_custom_call.1']
    #allocation5 [shape = 's32[1]{0}', space=sflag, size = 0x4, scoped, tag = 'scoped memory for tpu_custom_call.1']
    #allocation6 [shape = 'u8[24576]{0}', space=vmem, size = 0x6000, scoped, tag = 'input window, operand 1, single buffered']
    #allocation7 [shape = 'u8[8192]{0}', space=vmem, size = 0x2000, scoped, tag = 'output window, operand 0, single buffered']
    %7 = vsyncpa [#allocation5], 0
    %8 = vsyncpa [#allocation3], 0
    %9 = vsyncpa [#allocation4], 0
    // Predicated region
    $region2: #{tpu_custom_call.1} parent=1 // pred_check
      _
    $region3: #{tpu_custom_call.1} parent=1 // pred_check_branch
      %11 = sbr.rel (0) target = $region5
    $region4: #{tpu_custom_call.1} parent=1 // pred_region
      %s13 = ssub.s32 16, 16
      %14 = vsyncadd [#allocation5], %s13
      %17 = dma.hbm_to_smem %s0, 16, [#allocation2], [#allocation5]
    $region5: #{tpu_custom_call.1} parent=1 // pred_fallthru
      _
    // Predicated region
    $region6: #{tpu_custom_call.1} parent=1 // pred_check
      _
    $region7: #{tpu_custom_call.1} parent=1 // pred_check_branch
      %19 = sbr.rel (0) target = $region9
    $region8: #{tpu_custom_call.1} parent=1 // pred_region
      %s21 = ssub.s32 768, 768
      %22 = vsyncadd [#allocation3], %s21
      %s23 = sshll.u32 [#allocation6], 4
      %s24 = int_to_ptr.vmem [resolvable:$true] %s23
      %29 = dma.hbm_to_vmem [thread:$0]  %s1, 768, %s24, [#allocation3], 128, 128, 8
    $region9: #{tpu_custom_call.1} parent=1 // pred_fallthru
      _
    // Predicated region
    $region10: #{tpu_custom_call.1} parent=1 // pred_check
      _
    $region11: #{tpu_custom_call.1} parent=1 // pred_check_branch
      %31 = sbr.rel (0) target = $region13
    $region12: #{tpu_custom_call.1} parent=1 // pred_region
      %32 = dma.done [#allocation5], 16
    $region13: #{tpu_custom_call.1} parent=1 // pred_fallthru
      _
    // Predicated region
    $region14: #{tpu_custom_call.1} parent=1 // pred_check
      _
    $region15: #{tpu_custom_call.1} parent=1 // pred_check_branch
      %34 = sbr.rel (0) target = $region17
    $region16: #{tpu_custom_call.1} parent=1 // pred_region
      %35 = dma.done [#allocation3], 768
    $region17: #{tpu_custom_call.1} parent=1 // pred_fallthru
      _
    %36 = sfence
    %v37 = vld [vmem:[#allocation6] sm:$0xff]
    %v38 = vld [vmem:[#allocation6 + $0x8] sm:$0xff]
    %s39 = sld [smem:[#allocation2]]
    %v40 = vmul.f32 %v37, %v37
    %v41 = vmul.f32 %v38, %v38
    %v42 = vstv %s39
    %v43 = vmul.f32 %v42, %v40
    %v44 = vmul.f32 %v42, %v41
    %s45 = scalar_lea.vmem [#allocation6], 16
    %v46 = vld [vmem:[%s45] sm:$0xff]
    %v47 = vld [vmem:[%s45 + $0x8] sm:$0xff]
    %s48 = sld [smem:[#allocation2 + $0x1]]
    %v49 = vmul.f32 %v46, %v46
    %v50 = vmul.f32 %v47, %v47
    %v51 = vstv %s48
    %v52 = vmul.f32 %v51, %v49
    %v53 = vmul.f32 %v51, %v50
    %v54 = vadd.f32 %v43, %v52
    %v55 = vadd.f32 %v44, %v53
    %s56 = scalar_lea.vmem [#allocation6], 32
    %v57 = vld [vmem:[%s56] sm:$0xff]
    %v58 = vld [vmem:[%s56 + $0x8] sm:$0xff]
    %s59 = sld [smem:[#allocation2 + $0x2]]
    %v60 = vmul.f32 %v57, %v57
    %v61 = vmul.f32 %v58, %v58
    %v62 = vstv %s59
    %v63 = vmul.f32 %v62, %v60
    %v64 = vmul.f32 %v62, %v61
    %v65 = vadd.f32 %v54, %v63
    %v66 = vadd.f32 %v55, %v64
    %67 = vst [vmem:[#allocation7] sm:$0xff] %v65
    %68 = vst [vmem:[#allocation7 + $0x8] sm:$0xff] %v66
    // Predicated region
    $region18: #{tpu_custom_call.1} parent=1 // pred_check
      _
    $region19: #{tpu_custom_call.1} parent=1 // pred_check_branch
      %70 = sbr.rel (0) target = $region21
    $region20: #{tpu_custom_call.1} parent=1 // pred_region
      %s72 = ssub.s32 256, 256
      %73 = vsyncadd [#allocation4], %s72
      %s74 = sshll.u32 [#allocation7], 4
      %s75 = int_to_ptr.vmem [resolvable:$true] %s74
      %80 = dma.vmem_to_hbm [thread:$0]  %s75, 256, %s2, [#allocation4], 128, 128, 8
    $region21: #{tpu_custom_call.1} parent=1 // pred_fallthru
      _
    // Predicated region
    $region22: #{tpu_custom_call.1} parent=1 // pred_check
      _
    $region23: #{tpu_custom_call.1} parent=1 // pred_check_branch
      %82 = sbr.rel (0) target = $region25
    $region24: #{tpu_custom_call.1} parent=1 // pred_region
      %83 = dma.done [#allocation4], 256
    $region25: #{tpu_custom_call.1} parent=1 // pred_fallthru
      _
    %84 = vsyncpa [#allocation3], 1
    %85 = vsyncpa [#allocation4], 1
    %86 = vsyncpa [#allocation5], 1

</llo_original>
